<compile_context>
chip_gen: v5e
topology: v5e:2x2
jax: 0.10.0
libtpu: 0.0.40
codegen_flags: <defaults>
</compile_context>

<pallas_src>
import jax
import jax.numpy as jnp
from jax.experimental import pallas as pl
from jax.experimental.pallas import tpu as pltpu


def _awl_kernel(l_ref, p_ref, out_ref):
    # l_ref: (1, num) f32 in VMEM  (task losses)
    # p_ref: (1, num) f32 in VMEM  (learnable weights)
    # out_ref: (1, 1) f32 in SMEM  (scalar result)
    l = l_ref[...]
    p = p_ref[...]
    p2 = p * p
    # 0.5 / p^2 * l  ->  l * (0.5 * reciprocal(p2)); approx=False keeps the
    # 1e-6 tolerance.  log(1 + p^2) -> log1p(p2) for robustness at small p.
    terms = l * (0.5 * pl.reciprocal(p2, approx=False)) + jnp.log1p(p2)
    out_ref[0, 0] = jnp.sum(terms)


def automatic_weighted_loss(losses, params):
    """losses: (num,) f32 array of scalar task losses; params: (num,) f32.

    Returns the scalar automatically-weighted multi-task loss.
    """
    num = losses.shape[0]
    # Zero-copy reshapes only (contiguous (num,) -> (1, num)); no packing op.
    l2d = losses.astype(jnp.float32).reshape(1, num)
    p2d = params.astype(jnp.float32).reshape(1, num)

    out = pl.pallas_call(
        _awl_kernel,
        out_shape=jax.ShapeDtypeStruct((1, 1), jnp.float32),
        in_specs=[
            pl.BlockSpec(memory_space=pltpu.MemorySpace.VMEM),
            pl.BlockSpec(memory_space=pltpu.MemorySpace.VMEM),
        ],
        out_specs=pl.BlockSpec(memory_space=pltpu.MemorySpace.SMEM),
        cost_estimate=pl.CostEstimate(
            flops=10 * num,
            transcendentals=2 * num,
            bytes_accessed=8 * num + 4,
        ),
    )(l2d, p2d)
    return out[0, 0]


if __name__ == "__main__":
    num = 2  # default num of losses in AutomaticWeightedLoss(num=2)

    # Deterministic parameter init, matching torch.ones(num)
    params = jnp.ones((num,), dtype=jnp.float32)

    # Deterministic example "task losses" (scalars)
    key = jax.random.PRNGKey(0)
    losses = jax.random.uniform(key, (num,), dtype=jnp.float32, minval=0.5, maxval=2.0)

    result = automatic_weighted_loss(losses, params)
    jax.block_until_ready(result)

    # Pure-JAX reference check (same math as the PyTorch forward)
    ref = jnp.sum(0.5 / params**2 * losses + jnp.log(1.0 + params**2))
    assert jnp.allclose(result, ref, rtol=1e-6, atol=1e-6), (result, ref)

    print("KERNEL_OK")
</pallas_src>

<mosaic_0001>
module attributes {stable_mosaic.version = 11 : i64} {
  func.func @_awl_kernel(%arg0: memref<1x2xf32, #tpu.memory_space<vmem>>, %arg1: memref<1x2xf32, #tpu.memory_space<vmem>>, %arg2: memref<1x1xf32, #tpu.memory_space<smem>>) attributes {dimension_semantics = [], scalar_prefetch = 0 : i64, scratch_operands = 0 : i64, tpu.core_type = #tpu.core_type<tc>} {
    %c0 = arith.constant 0 : index
    %c0_0 = arith.constant 0 : index
    %0 = vector.load %arg0[%c0, %c0_0] : memref<1x2xf32, #tpu.memory_space<vmem>>, vector<1x2xf32>
    %c0_1 = arith.constant 0 : index
    %c0_2 = arith.constant 0 : index
    %1 = vector.load %arg1[%c0_1, %c0_2] : memref<1x2xf32, #tpu.memory_space<vmem>>, vector<1x2xf32>
    %2 = arith.mulf %1, %1 : vector<1x2xf32>
    %3 = tpu.reciprocal %2 : vector<1x2xf32> -> vector<1x2xf32>
    %cst = arith.constant 5.000000e-01 : f32
    %4 = vector.broadcast %cst : f32 to vector<1x2xf32>
    %5 = arith.mulf %4, %3 : vector<1x2xf32>
    %6 = arith.mulf %0, %5 : vector<1x2xf32>
    %7 = math.log1p %2 : vector<1x2xf32>
    %8 = arith.addf %6, %7 : vector<1x2xf32>
    %9 = vector.shape_cast %8 : vector<1x2xf32> to vector<1x1x2xf32>
    %cst_3 = arith.constant dense<0.000000e+00> : vector<1xf32>
    %10 = vector.multi_reduction <add>, %9, %cst_3 [1, 2] : vector<1x1x2xf32> to vector<1xf32>
    %11 = vector.shape_cast %10 : vector<1xf32> to vector<1x1x1xf32>
    %12 = vector.extract %11[0, 0, 0] : f32 from vector<1x1x1xf32>
    %c0_4 = arith.constant 0 : index
    %c0_5 = arith.constant 0 : index
    %13 = memref.load %arg2[%c0_4, %c0_5] : memref<1x1xf32, #tpu.memory_space<smem>>
    memref.store %12, %arg2[%c0_4, %c0_5] : memref<1x1xf32, #tpu.memory_space<smem>>
    return
  }
}

</mosaic_0001>

<llo_original>
// kernel: tpu_custom_call.1
$region0: #{tpu_custom_call.1}
  #allocation0 [shape = 'u32[]', space=smem, size = 0x4, offset = 0x4, fixed_abs, tag = 'smem constant byte address 0x4 - core index']
  #allocation1 [shape = 'u32[72,128]{1,0:T(1,128)}', space=vmem, size = 0x9000, scoped, tag = 'internal scratch']
  %s0 = inlined_call_operand.hbm [shape: f32[1,2], index: 0, kind: input, shape index: {}]
  %s1 = inlined_call_operand.hbm [shape: f32[1,2], index: 1, kind: input, shape index: {}]
  %s2 = inlined_call_operand.hbm [shape: f32[1,1], index: 2, kind: output, shape index: {}]
  %s3 = sld [smem:[#allocation0]]
  $region26: #{tpu_custom_call.1} parent=0
    _
  %s5 = ssub.s32 1, %s3
  %s6 = scalar_select 0, %s5, %s3
  $region1: #{tpu_custom_call.1} parent=0
    #allocation2 [shape = 'u8[512]{0}', space=vmem, size = 0x400, scoped, tag = 'input window, operand 0, single buffered']
    #allocation3 [shape = 's32[1]{0}', space=sflag, size = 0x4, scoped, tag = 'scoped memory for tpu_custom_call.1']
    #allocation4 [shape = 's32[1]{0}', space=sflag, size = 0x4, scoped, tag = 'scoped memory for tpu_custom_call.1']
    #allocation5 [shape = 'u8[512]{0}', space=vmem, size = 0x400, scoped, tag = 'input window, operand 1, single buffered']
    #allocation6 [shape = 's32[1]{0}', space=sflag, size = 0x4, scoped, tag = 'scoped memory for tpu_custom_call.1']
    #allocation7 [shape = 'u8[512]{0}', space=smem, size = 0x200, scoped, tag = 'output window, operand 0, single buffered']
    %7 = vsyncpa [#allocation3], 0
    %8 = vsyncpa [#allocation6], 0
    %9 = vsyncpa [#allocation4], 0
    // Predicated region
    $region2: #{tpu_custom_call.1} parent=1 // pred_check
      _
    $region3: #{tpu_custom_call.1} parent=1 // pred_check_branch
      %11 = sbr.rel (0) target = $region5
    $region4: #{tpu_custom_call.1} parent=1 // pred_region
      %13 = vsyncadd [#allocation3], 0
      %s15 = sshll.u32 %s0, 4
      %s16 = int_to_ptr.hbm [resolvable:$true] %s15
      %s17 = sshll.u32 [#allocation2], 4
      %s18 = int_to_ptr.vmem [resolvable:$true] %s17
      %20 = dma.hbm_to_vmem [thread:$0]  %s16, 16, %s18, [#allocation3]
    $region5: #{tpu_custom_call.1} parent=1 // pred_fallthru
      _
    // Predicated region
    $region6: #{tpu_custom_call.1} parent=1 // pred_check
      _
    $region7: #{tpu_custom_call.1} parent=1 // pred_check_branch
      %22 = sbr.rel (0) target = $region9
    $region8: #{tpu_custom_call.1} parent=1 // pred_region
      %24 = vsyncadd [#allocation6], 0
      %s26 = sshll.u32 %s1, 4
      %s27 = int_to_ptr.hbm [resolvable:$true] %s26
      %s28 = sshll.u32 [#allocation5], 4
      %s29 = int_to_ptr.vmem [resolvable:$true] %s28
      %31 = dma.hbm_to_vmem [thread:$0]  %s27, 16, %s29, [#allocation6]
    $region9: #{tpu_custom_call.1} parent=1 // pred_fallthru
      _
    // Predicated region
    $region10: #{tpu_custom_call.1} parent=1 // pred_check
      _
    $region11: #{tpu_custom_call.1} parent=1 // pred_check_branch
      %33 = sbr.rel (0) target = $region13
    $region12: #{tpu_custom_call.1} parent=1 // pred_region
      %35 = dma.done [#allocation3], 16
    $region13: #{tpu_custom_call.1} parent=1 // pred_fallthru
      _
    // Predicated region
    $region14: #{tpu_custom_call.1} parent=1 // pred_check
      _
    $region15: #{tpu_custom_call.1} parent=1 // pred_check_branch
      %37 = sbr.rel (0) target = $region17
    $region16: #{tpu_custom_call.1} parent=1 // pred_region
      %39 = dma.done [#allocation6], 16
    $region17: #{tpu_custom_call.1} parent=1 // pred_fallthru
      _
    %v40 = vld [vmem:[#allocation2] sm:$0x1]
    %v41 = vld [vmem:[#allocation5] sm:$0x1]
    %v42 = vmul.f32 %v41, %v41
    %v43 = vrcp.pop %v42
    %v44 = vmul.f32 %v42, %v43
    %v45 = vsub.f32 1.0, %v44
    %v46 = vmul.f32 %v43, %v45
    %v47 = vadd.f32 %v43, %v46
    %vm48 = vweird.f32 %v42
    %vm49 = vweird.f32 %v43
    %vm50 = vmor %vm48, %vm49
    %v51 = vsel %vm50, %v43, %v47
    %v52 = vand.u32 2147483647, %v42
    %vm53 = vcmp.eq.f32.partialorder %v52, 8.507059e+37
    %v54 = vand.u32 %v42, 2147483648
    %v55 = vor.u32 1.1754944e-38, %v54
    %v56 = vsel %vm53, %v55, %v51
    %v57 = vmul.f32 %v56, 0.5
    %v58 = vmul.f32 %v40, %v57
    %v59 = vadd.f32 %v42, 1.0
    %v60 = vlog2.pop %v59
    %v61 = vmul.f32 %v60, 0.6931472
    %v62 = vmul.f32 -0.5, %v42
    %v63 = vadd.f32 %v62, 1.0
    %v64 = vmul.f32 %v63, %v42
    %v65 = vand.u32 2147483647, %v42
    %vm66 = vcmp.lt.f32.partialorder %v65, 0.0004427343
    %v67 = vsel %vm66, %v64, %v61
    %v68 = vadd.f32 %v58, %v67
    %vm69 = vcmask 8192
    %v70 = vsel %vm69, %v68, 0.0
    %71 = vadd.xlane.f32.xlu0 %v70
    %v72 = vpop.xlane.xlu0 %71
    %v73 = vrot.slane %v72, 4
    %v74 = vadd.f32 %v72, %v73
    %v75 = vrot.slane %v74, 2
    %v76 = vadd.f32 %v74, %v75
    %v77 = vrot.slane %v76, 1
    %v78 = vadd.f32 %v76, %v77
    %s79 = vtos %v78
    %s80 = scalar_lea.smem [#allocation7], 0
    %81 = sst [smem:[%s80]] %s79
    // Predicated region
    $region18: #{tpu_custom_call.1} parent=1 // pred_check
      _
    $region19: #{tpu_custom_call.1} parent=1 // pred_check_branch
      %83 = sbr.rel (0) target = $region21
    $region20: #{tpu_custom_call.1} parent=1 // pred_region
      %85 = vsyncadd [#allocation4], 0
      %s87 = sshll.u32 %s2, 4
      %s88 = int_to_ptr.hbm [resolvable:$true] %s87
      %90 = dma.smem_to_hbm [#allocation7], 16, %s88, [#allocation4]
    $region21: #{tpu_custom_call.1} parent=1 // pred_fallthru
      _
    // Predicated region
    $region22: #{tpu_custom_call.1} parent=1 // pred_check
      _
    $region23: #{tpu_custom_call.1} parent=1 // pred_check_branch
      %92 = sbr.rel (0) target = $region25
    $region24: #{tpu_custom_call.1} parent=1 // pred_region
      %94 = dma.done [#allocation4], 16
    $region25: #{tpu_custom_call.1} parent=1 // pred_fallthru
      _
    %95 = sfence
    %96 = vsyncpa [#allocation3], 1
    %97 = vsyncpa [#allocation6], 1
    %98 = vsyncpa [#allocation4], 1

</llo_original>
